<compile_context>
chip_gen: v7x
topology: tpu7x:2x2x1
jax: 0.10.0
libtpu: 0.0.40
codegen_flags: <defaults>
</compile_context>

<pallas_src>
import jax
import jax.numpy as jnp
from jax.experimental import pallas as pl
from jax.experimental.pallas import tpu as pltpu


def _round_up(x, m):
    return ((x + m - 1) // m) * m


def _fused_patch_proj_kernel(p_ref, w_ref, b_ref, o_ref):
    # p_ref: (TM, K)   w_ref: (K, E)   b_ref: (1, E)   o_ref: (TM, E)
    # Single fused matmul (conv-as-matmul folded with the Linear) + bias.
    o_ref[...] = (
        jnp.dot(p_ref[...], w_ref[...], preferred_element_type=jnp.float32)
        + b_ref[...]
    ).astype(o_ref.dtype)


def patch_embedding_forward(x, conv_w, conv_b, lin_w, lin_b, cls_token,
                            pos_embedding, patch_size):
    """x: (B, C, H, W) float32.  Returns (B, num_patches + 1, E) float32."""
    B, C, H, W = x.shape
    P = patch_size
    Hp, Wp = H // P, W // P
    N = Hp * Wp
    E = conv_w.shape[0]
    K = C * P * P

    # ---- glue: extract non-overlapping patches, flatten in (C, kh, kw) order
    # (matches nn.Conv2d weight layout), then flatten (B, N) -> rows. ----
    patches = (
        x.reshape(B, C, Hp, P, Wp, P)
        .transpose(0, 2, 4, 1, 3, 5)            # (B, Hp, Wp, C, P, P)
        .reshape(B * N, K)                      # (B*N, K)
    )

    # ---- fuse conv projection with the positional_encoding Linear ----
    wc = conv_w.reshape(E, K).T                 # (K, E)
    wl = lin_w.T                                # (E, E)   torch Linear: y = x W^T + b
    w_fused = (wc @ wl).astype(jnp.float32)     # (K, E)
    b_fused = (conv_b @ wl + lin_b).reshape(1, E).astype(jnp.float32)

    # ---- row tiling over the flattened (B*N) axis ----
    M = B * N
    TM = 256 if M >= 256 else _round_up(M, 8)
    M_pad = _round_up(M, TM)
    if M_pad != M:
        patches = jnp.pad(patches, ((0, M_pad - M), (0, 0)))

    flops = 2 * M_pad * K * E
    bytes_accessed = 4 * (M_pad * K + K * E + E + M_pad * E)

    y = pl.pallas_call(
        _fused_patch_proj_kernel,
        out_shape=jax.ShapeDtypeStruct((M_pad, E), jnp.float32),
        grid_spec=pltpu.PrefetchScalarGridSpec(
            num_scalar_prefetch=0,
            grid=(M_pad // TM,),
            in_specs=[
                pl.BlockSpec((TM, K), lambda i: (i, 0)),   # row tile of patches
                pl.BlockSpec((K, E), lambda i: (0, 0)),    # fused weight (resident)
                pl.BlockSpec((1, E), lambda i: (0, 0)),    # fused bias (resident)
            ],
            out_specs=pl.BlockSpec((TM, E), lambda i: (i, 0)),
        ),
        compiler_params=pltpu.CompilerParams(
            dimension_semantics=("parallel",)),
        cost_estimate=pl.CostEstimate(
            flops=flops, transcendentals=0, bytes_accessed=bytes_accessed),
    )(patches, w_fused, b_fused)

    # ---- glue: un-pad, add pos embedding, prepend cls row (cls bypasses the
    # Linear, matching the reference), dropout = identity (eval mode). ----
    y = y[:M].reshape(B, N, E)
    pos = pos_embedding.reshape(N + 1, E)
    cls_row = cls_token.reshape(1, E) + pos[0:1, :]               # (1, E)
    out = jnp.concatenate(
        [jnp.broadcast_to(cls_row[None], (B, 1, E)), y + pos[1:, :]], axis=1)
    return out


if __name__ == "__main__":
    # Small shapes consistent with the module:
    #   in_channels=4, embedding_dim=32, patch_size=4, image 16x16 -> num_patches=16
    B, C, H, W = 2, 4, 16, 16
    P = 4
    E = 32
    N = (H // P) * (W // P)

    key = jax.random.PRNGKey(0)
    ks = jax.random.split(key, 8)
    x = jax.random.normal(ks[0], (B, C, H, W), dtype=jnp.float32)
    conv_w = jax.random.normal(ks[1], (E, C, P, P), dtype=jnp.float32) * 0.05
    conv_b = jax.random.normal(ks[2], (E,), dtype=jnp.float32) * 0.05
    lin_w = jax.random.normal(ks[3], (E, E), dtype=jnp.float32) * 0.05
    lin_b = jax.random.normal(ks[4], (E,), dtype=jnp.float32) * 0.05
    cls_token = jax.random.normal(ks[5], (1, 1, E), dtype=jnp.float32)
    pos_embedding = jax.random.normal(ks[6], (1, N + 1, E), dtype=jnp.float32)

    out = patch_embedding_forward(x, conv_w, conv_b, lin_w, lin_b,
                                  cls_token, pos_embedding, P)
    jax.block_until_ready(out)

    # Reference check in plain JAX (unfused, conv-as-matmul semantics).
    patches = x.reshape(B, C, H // P, P, W // P, P).transpose(0, 2, 4, 1, 3, 5)
    patches = patches.reshape(B, N, C * P * P)
    conv_out = patches @ conv_w.reshape(E, -1).T + conv_b          # (B, N, E)
    lin_out = conv_out @ lin_w.T + lin_b                           # (B, N, E)
    ref = jnp.concatenate(
        [jnp.broadcast_to(cls_token, (B, 1, E)), lin_out], axis=1) + pos_embedding
    assert out.shape == (B, N + 1, E)
    assert jnp.allclose(out, ref, atol=1e-4, rtol=1e-4)

    print("KERNEL_OK")
</pallas_src>

<mosaic_0001>
module attributes {stable_mosaic.version = 11 : i64} {
  func.func @_fused_patch_proj_kernel(%arg0: i32, %arg1: memref<32x64xf32, #tpu.memory_space<vmem>>, %arg2: memref<64x32xf32, #tpu.memory_space<vmem>>, %arg3: memref<1x32xf32, #tpu.memory_space<vmem>>, %arg4: memref<32x32xf32, #tpu.memory_space<vmem>>) attributes {dimension_semantics = [#tpu.dimension_semantics<parallel>], iteration_bounds = array<i64: 1>, scalar_prefetch = 0 : i64, scratch_operands = 0 : i64, tpu.core_type = #tpu.core_type<tc>, window_params = [{transform_indices = @transform_0, window_bounds = array<i64: 32, 64>}, {pipeline_mode = #tpu.pipeline_mode<synchronous>, transform_indices = @transform_1, window_bounds = array<i64: 64, 32>}, {pipeline_mode = #tpu.pipeline_mode<synchronous>, transform_indices = @transform_2, window_bounds = array<i64: 1, 32>}, {transform_indices = @transform_3, window_bounds = array<i64: 32, 32>}]} {
    %c0 = arith.constant 0 : index
    %c0_0 = arith.constant 0 : index
    %0 = vector.load %arg1[%c0, %c0_0] : memref<32x64xf32, #tpu.memory_space<vmem>>, vector<32x64xf32>
    %c0_1 = arith.constant 0 : index
    %c0_2 = arith.constant 0 : index
    %1 = vector.load %arg2[%c0_1, %c0_2] : memref<64x32xf32, #tpu.memory_space<vmem>>, vector<64x32xf32>
    %cst = arith.constant dense<0.000000e+00> : vector<32x32xf32>
    %2 = tpu.matmul %0, %1, %cst {dimension_numbers = #tpu.dot_dimension_numbers<[1], [0], [0], [1], [0, 0, 1, 1], [], []>} : vector<32x64xf32>, vector<64x32xf32>, vector<32x32xf32> -> vector<32x32xf32>
    %c0_3 = arith.constant 0 : index
    %c0_4 = arith.constant 0 : index
    %3 = vector.load %arg3[%c0_3, %c0_4] : memref<1x32xf32, #tpu.memory_space<vmem>>, vector<1x32xf32>
    %4 = vector.broadcast %3 : vector<1x32xf32> to vector<32x32xf32>
    %5 = arith.addf %2, %4 : vector<32x32xf32>
    %c0_5 = arith.constant 0 : index
    %c0_6 = arith.constant 0 : index
    %6 = vector.load %arg4[%c0_5, %c0_6] : memref<32x32xf32, #tpu.memory_space<vmem>>, vector<32x32xf32>
    tpu.vector_store %arg4[%c0_5, %c0_6], %5 {strides = array<i32>} : memref<32x32xf32, #tpu.memory_space<vmem>>, vector<32x32xf32>,
    return
  }
  func.func @transform_0(%arg0: i32) -> (i32, i32) {
    %c0_i32 = arith.constant 0 : i32
    %c0_i32_0 = arith.constant 0 : i32
    return %arg0, %c0_i32 : i32, i32
  }
  func.func @transform_1(%arg0: i32) -> (i32, i32) {
    %c0_i32 = arith.constant 0 : i32
    %c0_i32_0 = arith.constant 0 : i32
    %c0_i32_1 = arith.constant 0 : i32
    return %c0_i32, %c0_i32_0 : i32, i32
  }
  func.func @transform_2(%arg0: i32) -> (i32, i32) {
    %c0_i32 = arith.constant 0 : i32
    %c0_i32_0 = arith.constant 0 : i32
    %c0_i32_1 = arith.constant 0 : i32
    return %c0_i32, %c0_i32_0 : i32, i32
  }
  func.func @transform_3(%arg0: i32) -> (i32, i32) {
    %c0_i32 = arith.constant 0 : i32
    %c0_i32_0 = arith.constant 0 : i32
    return %arg0, %c0_i32 : i32, i32
  }
}

</mosaic_0001>

<llo_original>
// kernel: tpu_custom_call.1
$region0: #{tpu_custom_call.1}
  #allocation0 [shape = 'u32[]', space=smem, size = 0x4, offset = 0x4, fixed_abs, tag = 'smem constant byte address 0x4 - core index']
  #allocation1 [shape = 'u32[144,128]{1,0:T(1,128)}', space=vmem, size = 0x12000, scoped, tag = 'internal scratch']
  %s0 = inlined_call_operand.vmem [shape: f32[32,64], index: 0, kind: input, shape index: {}]
  %s1 = inlined_call_operand.vmem [shape: f32[64,32], index: 1, kind: input, shape index: {}]
  %s2 = inlined_call_operand.vmem [shape: f32[1,32], index: 2, kind: input, shape index: {}]
  %s3 = inlined_call_operand.hbm [shape: f32[32,32], index: 3, kind: output, shape index: {}]
  %s4 = sld [smem:[#allocation0]]
  $region22: #{tpu_custom_call.1} parent=0
    _
  %s6 = ssub.s32 1, %s4
  %s7 = scalar_select 0, %s6, %s4
  $region1: #{tpu_custom_call.1} parent=0
    #allocation2 [shape = 'u8[16384]{0}', space=vmem, size = 0x4000, scoped, tag = 'output window, operand 0, single buffered']
    #allocation3 [shape = 's32[1]{0}', space=sflag, size = 0x4, scoped, tag = 'scoped memory for tpu_custom_call.1']
    %8 = vsyncpa [#allocation3], 0
    // Predicated region
    $region2: #{tpu_custom_call.1} parent=1 // pred_check
      _
    $region3: #{tpu_custom_call.1} parent=1 // pred_check_branch
      %10 = sbr.rel (0) target = $region5
    $region4: #{tpu_custom_call.1} parent=1 // pred_region
      _
    $region5: #{tpu_custom_call.1} parent=1 // pred_fallthru
      _
    // Predicated region
    $region6: #{tpu_custom_call.1} parent=1 // pred_check
      _
    $region7: #{tpu_custom_call.1} parent=1 // pred_check_branch
      %12 = sbr.rel (0) target = $region9
    $region8: #{tpu_custom_call.1} parent=1 // pred_region
      _
    $region9: #{tpu_custom_call.1} parent=1 // pred_fallthru
      _
    // Predicated region
    $region10: #{tpu_custom_call.1} parent=1 // pred_check
      _
    $region11: #{tpu_custom_call.1} parent=1 // pred_check_branch
      %14 = sbr.rel (0) target = $region13
    $region12: #{tpu_custom_call.1} parent=1 // pred_region
      _
    $region13: #{tpu_custom_call.1} parent=1 // pred_fallthru
      _
    %v15 = vld [vmem:[%s0] sm:$0xff]
    %v16 = vld [vmem:[%s0 + $0x8] sm:$0xff]
    %v17 = vld [vmem:[%s0 + $0x10] sm:$0xff]
    %v18 = vld [vmem:[%s0 + $0x18] sm:$0xff]
    %v19 = vld [vmem:[%s1] sm:$0xff]
    %v20 = vld [vmem:[%s1 + $0x8] sm:$0xff]
    %v21 = vld [vmem:[%s1 + $0x10] sm:$0xff]
    %v22 = vld [vmem:[%s1 + $0x18] sm:$0xff]
    %v23 = vld [vmem:[%s1 + $0x20] sm:$0xff]
    %v24 = vld [vmem:[%s1 + $0x28] sm:$0xff]
    %v25 = vld [vmem:[%s1 + $0x30] sm:$0xff]
    %v26 = vld [vmem:[%s1 + $0x38] sm:$0xff]
    %v27 = vld [vmem:[%s2] sm:$0x1]
    %v29 = vlaneseq
    %v30 = vshrl.u32 %v29, 7
    %v31 = vsub.s32 0, %v30
    %v32 = vrot.slane %v27, %v31
    %vm34 = vcmask 523264
    %v36 = vsel %vm34, %v15, 0
    %v39 = vsel %vm34, %v16, 0
    %v42 = vsel %vm34, %v17, 0
    %v45 = vsel %vm34, %v18, 0
    %47 = vmatprep.subr.mxu0 0.0
    %48 = vmatpush1.msra.mxu0 %v19
    %49 = vmatprep.subr.mxu0 0.0
    %50 = vmatpush1.msra.mxu0 %v20
    %51 = vmatprep.subr.mxu0 0.0
    %52 = vmatpush1.msra.mxu0 %v21
    %53 = vmatprep.subr.mxu0 0.0
    %54 = vmatpush1.msra.mxu0 %v22
    %55 = vmatprep.subr.mxu0 0.0
    %56 = vmatpush1.msra.mxu0 %v23
    %57 = vmatprep.subr.mxu0 0.0
    %58 = vmatpush1.msra.mxu0 %v24
    %59 = vmatprep.subr.mxu0 0.0
    %60 = vmatpush1.msra.mxu0 %v25
    %61 = vmatprep.subr.mxu0 0.0
    %62 = vmatpush1.msra.mxu0 %v26
    %63 = vmatprep.subr.mxu0 0.0
    %64 = vmatpush1.msra.mxu0 0.0
    %65 = vmatprep.subr.mxu0 0.0
    %66 = vmatpush1.msra.mxu0 0.0
    %67 = vmatprep.subr.mxu0 0.0
    %68 = vmatpush1.msra.mxu0 0.0
    %69 = vmatprep.subr.mxu0 0.0
    %70 = vmatpush1.msra.mxu0 0.0
    %71 = vmatprep.subr.mxu0 0.0
    %72 = vmatpush1.msra.mxu0 0.0
    %73 = vmatprep.subr.mxu0 0.0
    %74 = vmatpush1.msra.mxu0 0.0
    %75 = vmatprep.subr.mxu0 0.0
    %76 = vmatpush1.msra.mxu0 0.0
    %77 = vmatprep.subr.mxu0 0.0
    %78 = vmatpush1.msra.mxu0 0.0
    %79 = vmatprep.subr.mxu0 0.0
    %80 = vmatpush1.msra.mxu0 0.0
    %81 = vmatprep.subr.mxu0 0.0
    %82 = vmatpush1.msra.mxu0 0.0
    %83 = vmatprep.subr.mxu0 0.0
    %84 = vmatpush1.msra.mxu0 0.0
    %85 = vmatprep.subr.mxu0 0.0
    %86 = vmatpush1.msra.mxu0 0.0
    %87 = vmatprep.subr.mxu0 0.0
    %88 = vmatpush1.msra.mxu0 0.0
    %89 = vmatprep.subr.mxu0 0.0
    %90 = vmatpush1.msra.mxu0 0.0
    %91 = vmatprep.subr.mxu0 0.0
    %92 = vmatpush1.msra.mxu0 0.0
    %93 = vmatprep.subr.mxu0 0.0
    %94 = vmatpush1.msra.mxu0 0.0
    %95 = vmatprep.subr.mxu0 0.0
    %96 = vmatpush1.msra.mxu0 0.0
    %97 = vmatprep.subr.mxu0 0.0
    %98 = vmatpush1.msra.mxu0 0.0
    %99 = vmatprep.subr.mxu0 0.0
    %100 = vmatpush1.msra.mxu0 0.0
    %101 = vmatprep.subr.mxu0 0.0
    %102 = vmatpush1.msra.mxu0 0.0
    %103 = vmatprep.subr.mxu0 0.0
    %104 = vmatpush1.msra.mxu0 0.0
    %105 = vmatprep.subr.mxu0 0.0
    %106 = vmatpush1.msra.mxu0 0.0
    %107 = vmatprep.subr.mxu0 0.0
    %108 = vmatpush1.msra.mxu0 0.0
    %109 = vmatprep.subr.mxu0 0.0
    %110 = vmatpush1.msra.mxu0 0.0
    %111 = vmatprep.mubr.f32.mxu0 0.0
    %112 = vmatmul.mubr.f32.gmra.mrb[0].mxu0 %v36
    %v113 = vpop.f32.mrb[0].mxu0
    %v114 = vadd.f32 %v32, %v113
    %v115 = vpop.f32.mrb[0].mxu0
    %116 = vmatprep.mubr.f32.mxu0 0.0
    %117 = vmatmul.mubr.f32.gmra.mrb[0].mxu0 %v39
    %v118 = vpop.f32.mrb[0].mxu0
    %v119 = vadd.f32 %v32, %v118
    %v120 = vpop.f32.mrb[0].mxu0
    %121 = vmatprep.mubr.f32.mxu0 0.0
    %122 = vmatmul.mubr.f32.gmra.mrb[0].mxu0 %v42
    %v123 = vpop.f32.mrb[0].mxu0
    %v124 = vadd.f32 %v32, %v123
    %v125 = vpop.f32.mrb[0].mxu0
    %126 = vmatprep.mubr.f32.mxu0 0.0
    %127 = vmatmul.mubr.f32.gmra.mrb[0].mxu0 %v45
    %v128 = vpop.f32.mrb[0].mxu0
    %v129 = vadd.f32 %v32, %v128
    %v130 = vpop.f32.mrb[0].mxu0
    %131 = vdwg.mxu0
    %vm132 = vcmask 261120
    %133 = vst.msk [vmem:[#allocation2] sm:$0xff] %vm132, %v114
    %134 = vst.msk [vmem:[#allocation2 + $0x8] sm:$0xff] %vm132, %v119
    %135 = vst.msk [vmem:[#allocation2 + $0x10] sm:$0xff] %vm132, %v124
    %136 = vst.msk [vmem:[#allocation2 + $0x18] sm:$0xff] %vm132, %v129
    // Predicated region
    $region14: #{tpu_custom_call.1} parent=1 // pred_check
      _
    $region15: #{tpu_custom_call.1} parent=1 // pred_check_branch
      %138 = sbr.rel (0) target = $region17
    $region16: #{tpu_custom_call.1} parent=1 // pred_region
      %s140 = ssub.s32 512, 512
      %141 = vsyncadd [#allocation3], %s140
      %s142 = sshll.u32 [#allocation2], 4
      %s143 = int_to_ptr.vmem [resolvable:$true] %s142
      %148 = dma.vmem_to_hbm [thread:$0]  %s143, 512, %s3, [#allocation3], 128, 128, 8
    $region17: #{tpu_custom_call.1} parent=1 // pred_fallthru
      _
    // Predicated region
    $region18: #{tpu_custom_call.1} parent=1 // pred_check
      _
    $region19: #{tpu_custom_call.1} parent=1 // pred_check_branch
      %150 = sbr.rel (0) target = $region21
    $region20: #{tpu_custom_call.1} parent=1 // pred_region
      %151 = dma.done [#allocation3], 512
    $region21: #{tpu_custom_call.1} parent=1 // pred_fallthru
      _
    %152 = vsyncpa [#allocation3], 1

</llo_original>
